<compile_context>
chip_gen: v6e
topology: v6e:2x2x1
jax: 0.10.0
libtpu: 0.0.40
codegen_flags: <defaults>
</compile_context>

<pallas_src>
import functools

import jax
import jax.numpy as jnp
from jax.experimental import pallas as pl
from jax.experimental.pallas import tpu as pltpu

LANE = 128
SUBLANE = 8


def dqn_mlp_kernel(x_ref, w1_ref, b1_ref, w2_ref, b2_ref, w3_ref, b3_ref, o_ref):
    """relu(x@W1+b1) -> relu(@W2+b2) -> @W3+b3; bf16 MXU operands, f32 accumulate."""
    x = x_ref[...].astype(jnp.bfloat16)                                 # in-kernel cast (VPU)
    h1 = jnp.dot(x, w1_ref[...], preferred_element_type=jnp.float32) + b1_ref[...]
    h1 = jnp.maximum(h1, 0.0).astype(jnp.bfloat16)                      # [TB, 128]
    h2 = jnp.dot(h1, w2_ref[...], preferred_element_type=jnp.float32) + b2_ref[...]
    h2 = jnp.maximum(h2, 0.0).astype(jnp.bfloat16)                      # [TB, 128]
    q = jnp.dot(h2, w3_ref[...], preferred_element_type=jnp.float32) + b3_ref[...]
    o_ref[...] = q.astype(o_ref.dtype)                                  # bf16 [TB, out]


@functools.partial(jax.jit, static_argnames=("tb",))
def dqn_forward(x, params, *, tb=4096):
    """x: [B, input_dim] float32. params: dict (w1,b1,w2,b2,w3,b3).

    Returns [B, out_dim] bfloat16 Q-values (cast to f32 outside if a consumer
    truly needs it — keeping the HBM write narrow is a net win here).
    """
    w1, b1, w2, b2, w3, b3 = (params[k] for k in ("w1", "b1", "w2", "b2", "w3", "b3"))
    B, in_dim = x.shape
    hidden = w1.shape[1]
    out_dim = w3.shape[1]

    # --- batch tile: multiple of 8 sublanes, large to amortize per-step overhead,
    #     but capped so the grid has >= 2 steps when the batch allows it (v7x: 2 TCs)
    tb = max(SUBLANE, (int(tb) // SUBLANE) * SUBLANE)
    two_step = (((B + 1) // 2 + SUBLANE - 1) // SUBLANE) * SUBLANE
    tb = min(tb, max(two_step, SUBLANE))
    grid = (pl.cdiv(B, tb),)            # ragged last tile handled by the pipeline

    # --- weights as bf16 MXU operands (tiny arrays; biases stay f32) ---
    w1b = w1.astype(jnp.bfloat16)
    w2b = w2.astype(jnp.bfloat16)
    w3b = w3.astype(jnp.bfloat16)

    flops = 2 * B * (in_dim * hidden + hidden * hidden + hidden * out_dim)
    bytes_accessed = (
        B * in_dim * x.dtype.itemsize            # x read (f32, cast in-kernel)
        + (w1b.size + w2b.size + w3b.size) * 2   # bf16 weights (VMEM-resident)
        + (b1.size + b2.size + b3.size) * 4      # f32 biases
        + B * out_dim * 2                        # bf16 output, unpadded lanes
    )

    out = pl.pallas_call(
        dqn_mlp_kernel,
        out_shape=jax.ShapeDtypeStruct((B, out_dim), jnp.bfloat16),
        grid=grid,
        in_specs=[
            pl.BlockSpec((tb, in_dim), lambda i: (i, 0)),       # x tile: streamed over batch
            pl.BlockSpec((in_dim, hidden), lambda i: (0, 0)),   # W1: VMEM-resident
            pl.BlockSpec((1, hidden), lambda i: (0, 0)),        # b1
            pl.BlockSpec((hidden, hidden), lambda i: (0, 0)),   # W2
            pl.BlockSpec((1, hidden), lambda i: (0, 0)),        # b2
            pl.BlockSpec((hidden, out_dim), lambda i: (0, 0)),  # W3 (unpadded N = out_dim)
            pl.BlockSpec((1, out_dim), lambda i: (0, 0)),       # b3
        ],
        out_specs=pl.BlockSpec((tb, out_dim), lambda i: (i, 0)),
        compiler_params=pltpu.CompilerParams(
            dimension_semantics=("parallel",),                  # both TCs on v7x; no-op on v5e/v6e
        ),
        cost_estimate=pl.CostEstimate(
            flops=int(flops), transcendentals=0, bytes_accessed=int(bytes_accessed)
        ),
    )(x, w1b, b1, w2b, b2, w3b, b3)

    return out


def init_params(key, input_dim, output_dim, hidden=128):
    """PyTorch-style uniform(-1/sqrt(fan_in), 1/sqrt(fan_in)) init; W stored as [in, out]."""
    keys = jax.random.split(key, 6)

    def linear(kw, kb, fan_in, fan_out):
        bound = 1.0 / jnp.sqrt(jnp.float32(fan_in))
        w = jax.random.uniform(kw, (fan_in, fan_out), jnp.float32, -bound, bound)
        b = jax.random.uniform(kb, (1, fan_out), jnp.float32, -bound, bound)
        return w, b

    w1, b1 = linear(keys[0], keys[1], input_dim, hidden)
    w2, b2 = linear(keys[2], keys[3], hidden, hidden)
    w3, b3 = linear(keys[4], keys[5], hidden, output_dim)
    return {"w1": w1, "b1": b1, "w2": w2, "b2": b2, "w3": w3, "b3": b3}


def reference_forward(x, p):
    h1 = jnp.maximum(x @ p["w1"] + p["b1"], 0.0)
    h2 = jnp.maximum(h1 @ p["w2"] + p["b2"], 0.0)
    return h2 @ p["w3"] + p["b3"]


if __name__ == "__main__":
    key = jax.random.PRNGKey(0)
    k_x, k_p = jax.random.split(key)

    batch = 8          # e.g. replay-buffer minibatch (kernel scales to 4096+ rows via tb)
    input_dim = 64     # state embedding size
    output_dim = 16    # number of candidate actions

    x = jax.random.normal(k_x, (batch, input_dim), dtype=jnp.float32)
    params = init_params(k_p, input_dim, output_dim)

    out = dqn_forward(x, params)
    out = jax.block_until_ready(out)

    ref = reference_forward(x, params)
    assert out.shape == (batch, output_dim)
    # bf16 matmul operands / bf16 output with f32 accumulation => ~1e-2 relative error,
    # acceptable for DQN Q-value inference.
    assert jnp.allclose(out, ref, atol=5e-2, rtol=5e-2), float(jnp.max(jnp.abs(out - ref)))

    print("KERNEL_OK")
</pallas_src>

<mosaic_0001>
module attributes {stable_mosaic.version = 11 : i64} {
  func.func @dqn_mlp_kernel(%arg0: i32, %arg1: memref<8x64xf32, #tpu.memory_space<vmem>>, %arg2: memref<64x128xbf16, #tpu.memory_space<vmem>>, %arg3: memref<1x128xf32, #tpu.memory_space<vmem>>, %arg4: memref<128x128xbf16, #tpu.memory_space<vmem>>, %arg5: memref<1x128xf32, #tpu.memory_space<vmem>>, %arg6: memref<128x16xbf16, #tpu.memory_space<vmem>>, %arg7: memref<1x16xf32, #tpu.memory_space<vmem>>, %arg8: memref<8x16xbf16, #tpu.memory_space<vmem>>) attributes {dimension_semantics = [#tpu.dimension_semantics<parallel>], iteration_bounds = array<i64: 1>, scalar_prefetch = 0 : i64, scratch_operands = 0 : i64, tpu.core_type = #tpu.core_type<tc>, window_params = [{transform_indices = @transform_0, window_bounds = array<i64: 8, 64>}, {pipeline_mode = #tpu.pipeline_mode<synchronous>, transform_indices = @transform_1, window_bounds = array<i64: 64, 128>}, {pipeline_mode = #tpu.pipeline_mode<synchronous>, transform_indices = @transform_2, window_bounds = array<i64: 1, 128>}, {pipeline_mode = #tpu.pipeline_mode<synchronous>, transform_indices = @transform_3, window_bounds = array<i64: 128, 128>}, {pipeline_mode = #tpu.pipeline_mode<synchronous>, transform_indices = @transform_4, window_bounds = array<i64: 1, 128>}, {pipeline_mode = #tpu.pipeline_mode<synchronous>, transform_indices = @transform_5, window_bounds = array<i64: 128, 16>}, {pipeline_mode = #tpu.pipeline_mode<synchronous>, transform_indices = @transform_6, window_bounds = array<i64: 1, 16>}, {transform_indices = @transform_7, window_bounds = array<i64: 8, 16>}]} {
    %c0 = arith.constant 0 : index
    %c0_0 = arith.constant 0 : index
    %0 = vector.load %arg1[%c0, %c0_0] : memref<8x64xf32, #tpu.memory_space<vmem>>, vector<8x64xf32>
    %1 = arith.truncf %0 : vector<8x64xf32> to vector<8x64xbf16>
    %c0_1 = arith.constant 0 : index
    %c0_2 = arith.constant 0 : index
    %2 = vector.load %arg2[%c0_1, %c0_2] : memref<64x128xbf16, #tpu.memory_space<vmem>>, vector<64x128xbf16>
    %cst = arith.constant dense<0.000000e+00> : vector<8x128xf32>
    %3 = tpu.matmul %1, %2, %cst {dimension_numbers = #tpu.dot_dimension_numbers<[1], [0], [0], [1], [0, 0, 1, 1], [], []>} : vector<8x64xbf16>, vector<64x128xbf16>, vector<8x128xf32> -> vector<8x128xf32>
    %c0_3 = arith.constant 0 : index
    %c0_4 = arith.constant 0 : index
    %4 = vector.load %arg3[%c0_3, %c0_4] : memref<1x128xf32, #tpu.memory_space<vmem>>, vector<1x128xf32>
    %5 = vector.broadcast %4 : vector<1x128xf32> to vector<8x128xf32>
    %6 = arith.addf %3, %5 : vector<8x128xf32>
    %cst_5 = arith.constant 0.000000e+00 : f32
    %7 = vector.broadcast %cst_5 : f32 to vector<8x128xf32>
    %8 = arith.maximumf %6, %7 : vector<8x128xf32>
    %9 = arith.truncf %8 : vector<8x128xf32> to vector<8x128xbf16>
    %c0_6 = arith.constant 0 : index
    %c0_7 = arith.constant 0 : index
    %10 = vector.load %arg4[%c0_6, %c0_7] : memref<128x128xbf16, #tpu.memory_space<vmem>>, vector<128x128xbf16>
    %cst_8 = arith.constant dense<0.000000e+00> : vector<8x128xf32>
    %11 = tpu.matmul %9, %10, %cst_8 {dimension_numbers = #tpu.dot_dimension_numbers<[1], [0], [0], [1], [0, 0, 1, 1], [], []>} : vector<8x128xbf16>, vector<128x128xbf16>, vector<8x128xf32> -> vector<8x128xf32>
    %c0_9 = arith.constant 0 : index
    %c0_10 = arith.constant 0 : index
    %12 = vector.load %arg5[%c0_9, %c0_10] : memref<1x128xf32, #tpu.memory_space<vmem>>, vector<1x128xf32>
    %13 = vector.broadcast %12 : vector<1x128xf32> to vector<8x128xf32>
    %14 = arith.addf %11, %13 : vector<8x128xf32>
    %cst_11 = arith.constant 0.000000e+00 : f32
    %15 = vector.broadcast %cst_11 : f32 to vector<8x128xf32>
    %16 = arith.maximumf %14, %15 : vector<8x128xf32>
    %17 = arith.truncf %16 : vector<8x128xf32> to vector<8x128xbf16>
    %c0_12 = arith.constant 0 : index
    %c0_13 = arith.constant 0 : index
    %18 = vector.load %arg6[%c0_12, %c0_13] : memref<128x16xbf16, #tpu.memory_space<vmem>>, vector<128x16xbf16>
    %cst_14 = arith.constant dense<0.000000e+00> : vector<8x16xf32>
    %19 = tpu.matmul %17, %18, %cst_14 {dimension_numbers = #tpu.dot_dimension_numbers<[1], [0], [0], [1], [0, 0, 1, 1], [], []>} : vector<8x128xbf16>, vector<128x16xbf16>, vector<8x16xf32> -> vector<8x16xf32>
    %c0_15 = arith.constant 0 : index
    %c0_16 = arith.constant 0 : index
    %20 = vector.load %arg7[%c0_15, %c0_16] : memref<1x16xf32, #tpu.memory_space<vmem>>, vector<1x16xf32>
    %21 = vector.broadcast %20 : vector<1x16xf32> to vector<8x16xf32>
    %22 = arith.addf %19, %21 : vector<8x16xf32>
    %23 = arith.truncf %22 : vector<8x16xf32> to vector<8x16xbf16>
    %c0_17 = arith.constant 0 : index
    %c0_18 = arith.constant 0 : index
    %24 = vector.load %arg8[%c0_17, %c0_18] : memref<8x16xbf16, #tpu.memory_space<vmem>>, vector<8x16xbf16>
    tpu.vector_store %arg8[%c0_17, %c0_18], %23 {strides = array<i32>} : memref<8x16xbf16, #tpu.memory_space<vmem>>, vector<8x16xbf16>,
    return
  }
  func.func @transform_0(%arg0: i32) -> (i32, i32) {
    %c0_i32 = arith.constant 0 : i32
    %c0_i32_0 = arith.constant 0 : i32
    return %arg0, %c0_i32 : i32, i32
  }
  func.func @transform_1(%arg0: i32) -> (i32, i32) {
    %c0_i32 = arith.constant 0 : i32
    %c0_i32_0 = arith.constant 0 : i32
    %c0_i32_1 = arith.constant 0 : i32
    return %c0_i32, %c0_i32_0 : i32, i32
  }
  func.func @transform_2(%arg0: i32) -> (i32, i32) {
    %c0_i32 = arith.constant 0 : i32
    %c0_i32_0 = arith.constant 0 : i32
    %c0_i32_1 = arith.constant 0 : i32
    return %c0_i32, %c0_i32_0 : i32, i32
  }
  func.func @transform_3(%arg0: i32) -> (i32, i32) {
    %c0_i32 = arith.constant 0 : i32
    %c0_i32_0 = arith.constant 0 : i32
    %c0_i32_1 = arith.constant 0 : i32
    return %c0_i32, %c0_i32_0 : i32, i32
  }
  func.func @transform_4(%arg0: i32) -> (i32, i32) {
    %c0_i32 = arith.constant 0 : i32
    %c0_i32_0 = arith.constant 0 : i32
    %c0_i32_1 = arith.constant 0 : i32
    return %c0_i32, %c0_i32_0 : i32, i32
  }
  func.func @transform_5(%arg0: i32) -> (i32, i32) {
    %c0_i32 = arith.constant 0 : i32
    %c0_i32_0 = arith.constant 0 : i32
    %c0_i32_1 = arith.constant 0 : i32
    return %c0_i32, %c0_i32_0 : i32, i32
  }
  func.func @transform_6(%arg0: i32) -> (i32, i32) {
    %c0_i32 = arith.constant 0 : i32
    %c0_i32_0 = arith.constant 0 : i32
    %c0_i32_1 = arith.constant 0 : i32
    return %c0_i32, %c0_i32_0 : i32, i32
  }
  func.func @transform_7(%arg0: i32) -> (i32, i32) {
    %c0_i32 = arith.constant 0 : i32
    %c0_i32_0 = arith.constant 0 : i32
    return %arg0, %c0_i32 : i32, i32
  }
}

</mosaic_0001>

<llo_original>
// kernel: dqn_forward.1
$region0: #{dqn_forward.1}
  #allocation0 [shape = 'u32[]', space=smem, size = 0x4, offset = 0x4, fixed_abs, tag = 'smem constant byte address 0x4 - core index']
  #allocation1 [shape = 'u32[144,128]{1,0:T(1,128)}', space=vmem, size = 0x12000, scoped, tag = 'internal scratch']
  %s0 = inlined_call_operand.vmem [shape: f32[8,64], index: 0, kind: input, shape index: {}]
  %s1 = inlined_call_operand.vmem [shape: bf16[64,128], index: 1, kind: input, shape index: {}]
  %s2 = inlined_call_operand.vmem [shape: f32[1,128], index: 2, kind: input, shape index: {}]
  %s3 = inlined_call_operand.vmem [shape: bf16[128,128], index: 3, kind: input, shape index: {}]
  %s4 = inlined_call_operand.vmem [shape: f32[1,128], index: 4, kind: input, shape index: {}]
  %s5 = inlined_call_operand.vmem [shape: bf16[128,16], index: 5, kind: input, shape index: {}]
  %s6 = inlined_call_operand.vmem [shape: f32[1,16], index: 6, kind: input, shape index: {}]
  %s7 = inlined_call_operand.hbm [shape: bf16[8,16], index: 7, kind: output, shape index: {}]
  %s8 = sld [smem:[#allocation0]]
  $region38: #{dqn_forward.1} parent=0
    _
  %s10 = ssub.s32 1, %s8
  %s11 = scalar_select 0, %s10, %s8
  $region1: #{dqn_forward.1} parent=0
    #allocation2 [shape = 'u8[2048]{0}', space=vmem, size = 0x800, scoped, tag = 'output window, operand 0, single buffered']
    #allocation3 [shape = 's32[1]{0}', space=sflag, size = 0x4, scoped, tag = 'scoped memory for dqn_forward.1']
    %12 = vsyncpa [#allocation3], 0
    // Predicated region
    $region2: #{dqn_forward.1} parent=1 // pred_check
      _
    $region3: #{dqn_forward.1} parent=1 // pred_check_branch
      %14 = sbr.rel (0) target = $region5
    $region4: #{dqn_forward.1} parent=1 // pred_region
      _
    $region5: #{dqn_forward.1} parent=1 // pred_fallthru
      _
    // Predicated region
    $region6: #{dqn_forward.1} parent=1 // pred_check
      _
    $region7: #{dqn_forward.1} parent=1 // pred_check_branch
      %16 = sbr.rel (0) target = $region9
    $region8: #{dqn_forward.1} parent=1 // pred_region
      _
    $region9: #{dqn_forward.1} parent=1 // pred_fallthru
      _
    // Predicated region
    $region10: #{dqn_forward.1} parent=1 // pred_check
      _
    $region11: #{dqn_forward.1} parent=1 // pred_check_branch
      %18 = sbr.rel (0) target = $region13
    $region12: #{dqn_forward.1} parent=1 // pred_region
      _
    $region13: #{dqn_forward.1} parent=1 // pred_fallthru
      _
    // Predicated region
    $region14: #{dqn_forward.1} parent=1 // pred_check
      _
    $region15: #{dqn_forward.1} parent=1 // pred_check_branch
      %20 = sbr.rel (0) target = $region17
    $region16: #{dqn_forward.1} parent=1 // pred_region
      _
    $region17: #{dqn_forward.1} parent=1 // pred_fallthru
      _
    // Predicated region
    $region18: #{dqn_forward.1} parent=1 // pred_check
      _
    $region19: #{dqn_forward.1} parent=1 // pred_check_branch
      %22 = sbr.rel (0) target = $region21
    $region20: #{dqn_forward.1} parent=1 // pred_region
      _
    $region21: #{dqn_forward.1} parent=1 // pred_fallthru
      _
    // Predicated region
    $region22: #{dqn_forward.1} parent=1 // pred_check
      _
    $region23: #{dqn_forward.1} parent=1 // pred_check_branch
      %24 = sbr.rel (0) target = $region25
    $region24: #{dqn_forward.1} parent=1 // pred_region
      _
    $region25: #{dqn_forward.1} parent=1 // pred_fallthru
      _
    // Predicated region
    $region26: #{dqn_forward.1} parent=1 // pred_check
      _
    $region27: #{dqn_forward.1} parent=1 // pred_check_branch
      %26 = sbr.rel (0) target = $region29
    $region28: #{dqn_forward.1} parent=1 // pred_region
      _
    $region29: #{dqn_forward.1} parent=1 // pred_fallthru
      _
    %v28 = vld [vmem:[%s0] sm:$0xff]
    %v29 = vpack.c.bf16 %v28, %v28
    %v30 = vld [vmem:[%s1] sm:$0xf]
    %v31 = vld [vmem:[%s1 + $0x4] sm:$0xf]
    %v32 = vld [vmem:[%s1 + $0x8] sm:$0xf]
    %v33 = vld [vmem:[%s1 + $0xc] sm:$0xf]
    %v34 = vld [vmem:[%s1 + $0x10] sm:$0xf]
    %v35 = vld [vmem:[%s1 + $0x14] sm:$0xf]
    %v36 = vld [vmem:[%s1 + $0x18] sm:$0xf]
    %v37 = vld [vmem:[%s1 + $0x1c] sm:$0xf]
    %v38 = vld [vmem:[%s2] sm:$0x1]
    %v40 = vlaneseq
    %v41 = vshrl.u32 %v40, 7
    %v42 = vsub.s32 0, %v41
    %v43 = vrot.slane %v38, %v42
    %v53 = vunpack.c.l.b16 %v30
    %v54 = vunpack.c.l.b16 %v31
    %v55 = vunpack.c.l.b16 %v32
    %v56 = vunpack.c.l.b16 %v33
    %v57 = vunpack.c.l.b16 %v34
    %v58 = vunpack.c.l.b16 %v35
    %v59 = vunpack.c.l.b16 %v36
    %v60 = vunpack.c.l.b16 %v37
    %v61 = vpack.c.b16 %v54, %v53
    %v62 = vpack.c.b16 %v56, %v55
    %v63 = vpack.c.b16 %v58, %v57
    %v64 = vpack.c.b16 %v60, %v59
    %vm69 = vcmask 523264
    %v71 = vsel %vm69, %v29, 0
    %73 = vmatprep.subr.bf16.mxu0 0
    %74 = vmatpush1.bf16.msra.mxu0 0
    %75 = vmatprep.subr.bf16.mxu0 0
    %76 = vmatpush1.bf16.msra.mxu0 0
    %77 = vmatprep.subr.bf16.mxu0 0
    %78 = vmatpush1.bf16.msra.mxu0 0
    %79 = vmatprep.subr.bf16.mxu0 0
    %80 = vmatpush1.bf16.msra.mxu0 0
    %81 = vmatprep.subr.bf16.mxu0 0
    %82 = vmatpush1.bf16.msra.mxu0 %v64
    %83 = vmatprep.subr.bf16.mxu0 0
    %84 = vmatpush1.bf16.msra.mxu0 %v63
    %85 = vmatprep.subr.bf16.mxu0 0
    %86 = vmatpush1.bf16.msra.mxu0 %v62
    %87 = vmatprep.subr.bf16.mxu0 0
    %88 = vmatpush1.bf16.msra.mxu0 %v61
    %89 = vmatprep.subr.bf16.mxu0 0
    %90 = vmatpush2.bf16.msra.mxu0 0
    %91 = vmatprep.subr.bf16.mxu0 0
    %92 = vmatpush2.bf16.msra.mxu0 0
    %93 = vmatprep.subr.bf16.mxu0 0
    %94 = vmatpush2.bf16.msra.mxu0 0
    %95 = vmatprep.subr.bf16.mxu0 0
    %96 = vmatpush2.bf16.msra.mxu0 0
    %97 = vmatprep.subr.bf16.mxu0 0
    %98 = vmatpush2.bf16.msra.mxu0 0
    %99 = vmatprep.subr.bf16.mxu0 0
    %100 = vmatpush2.bf16.msra.mxu0 0
    %101 = vmatprep.subr.bf16.mxu0 0
    %102 = vmatpush2.bf16.msra.mxu0 0
    %103 = vmatprep.subr.bf16.mxu0 0
    %104 = vmatpush2.bf16.msra.mxu0 0
    %105 = vmatprep.mubr.bf16.mxu0 0
    %106 = vmatmul.mubr.bf16.gmra.mxu0 %v71
    %v107 = vpop.f32.mrf.mxu0
    %v108 = vadd.f32 %v43, %v107
    %v109 = vpop.f32.mrf.mxu0
    %v110 = vpop.f32.mrf.mxu0
    %v111 = vpop.f32.mrf.mxu0
    %112 = vdwg.mxu0
    %v113 = vmax.f32 %v108, 0.0
    %v114 = vpack.c.bf16 %v113, %v113
    %v115 = vld [vmem:[%s3] sm:$0xf]
    %v116 = vld [vmem:[%s3 + $0x4] sm:$0xf]
    %v117 = vld [vmem:[%s3 + $0x8] sm:$0xf]
    %v118 = vld [vmem:[%s3 + $0xc] sm:$0xf]
    %v119 = vld [vmem:[%s3 + $0x10] sm:$0xf]
    %v120 = vld [vmem:[%s3 + $0x14] sm:$0xf]
    %v121 = vld [vmem:[%s3 + $0x18] sm:$0xf]
    %v122 = vld [vmem:[%s3 + $0x1c] sm:$0xf]
    %v123 = vld [vmem:[%s3 + $0x20] sm:$0xf]
    %v124 = vld [vmem:[%s3 + $0x24] sm:$0xf]
    %v125 = vld [vmem:[%s3 + $0x28] sm:$0xf]
    %v126 = vld [vmem:[%s3 + $0x2c] sm:$0xf]
    %v127 = vld [vmem:[%s3 + $0x30] sm:$0xf]
    %v128 = vld [vmem:[%s3 + $0x34] sm:$0xf]
    %v129 = vld [vmem:[%s3 + $0x38] sm:$0xf]
    %v130 = vld [vmem:[%s3 + $0x3c] sm:$0xf]
    %v131 = vld [vmem:[%s4] sm:$0x1]
    %v133 = vlaneseq
    %v134 = vshrl.u32 %v133, 7
    %v135 = vsub.s32 0, %v134
    %v136 = vrot.slane %v131, %v135
    %v154 = vunpack.c.l.b16 %v115
    %v155 = vunpack.c.l.b16 %v116
    %v156 = vunpack.c.l.b16 %v117
    %v157 = vunpack.c.l.b16 %v118
    %v158 = vunpack.c.l.b16 %v119
    %v159 = vunpack.c.l.b16 %v120
    %v160 = vunpack.c.l.b16 %v121
    %v161 = vunpack.c.l.b16 %v122
    %v162 = vunpack.c.l.b16 %v123
    %v163 = vunpack.c.l.b16 %v124
    %v164 = vunpack.c.l.b16 %v125
    %v165 = vunpack.c.l.b16 %v126
    %v166 = vunpack.c.l.b16 %v127
    %v167 = vunpack.c.l.b16 %v128
    %v168 = vunpack.c.l.b16 %v129
    %v169 = vunpack.c.l.b16 %v130
    %v170 = vpack.c.b16 %v155, %v154
    %v171 = vpack.c.b16 %v157, %v156
    %v172 = vpack.c.b16 %v159, %v158
    %v173 = vpack.c.b16 %v161, %v160
    %v174 = vpack.c.b16 %v163, %v162
    %v175 = vpack.c.b16 %v165, %v164
    %v176 = vpack.c.b16 %v167, %v166
    %v177 = vpack.c.b16 %v169, %v168
    %186 = vmatprep.subr.bf16.mxu0 0
    %187 = vmatpush1.bf16.msra.mxu0 %v177
    %188 = vmatprep.subr.bf16.mxu0 0
    %189 = vmatpush1.bf16.msra.mxu0 %v176
    %190 = vmatprep.subr.bf16.mxu0 0
    %191 = vmatpush1.bf16.msra.mxu0 %v175
    %192 = vmatprep.subr.bf16.mxu0 0
    %193 = vmatpush1.bf16.msra.mxu0 %v174
    %194 = vmatprep.subr.bf16.mxu0 0
    %195 = vmatpush1.bf16.msra.mxu0 %v173
    %196 = vmatprep.subr.bf16.mxu0 0
    %197 = vmatpush1.bf16.msra.mxu0 %v172
    %198 = vmatprep.subr.bf16.mxu0 0
    %199 = vmatpush1.bf16.msra.mxu0 %v171
    %200 = vmatprep.subr.bf16.mxu0 0
    %201 = vmatpush1.bf16.msra.mxu0 %v170
    %202 = vmatprep.subr.bf16.mxu0 0
    %203 = vmatpush2.bf16.msra.mxu0 0
    %204 = vmatprep.subr.bf16.mxu0 0
    %205 = vmatpush2.bf16.msra.mxu0 0
    %206 = vmatprep.subr.bf16.mxu0 0
    %207 = vmatpush2.bf16.msra.mxu0 0
    %208 = vmatprep.subr.bf16.mxu0 0
    %209 = vmatpush2.bf16.msra.mxu0 0
    %210 = vmatprep.subr.bf16.mxu0 0
    %211 = vmatpush2.bf16.msra.mxu0 0
    %212 = vmatprep.subr.bf16.mxu0 0
    %213 = vmatpush2.bf16.msra.mxu0 0
    %214 = vmatprep.subr.bf16.mxu0 0
    %215 = vmatpush2.bf16.msra.mxu0 0
    %216 = vmatprep.subr.bf16.mxu0 0
    %217 = vmatpush2.bf16.msra.mxu0 0
    %218 = vmatprep.mubr.bf16.mxu0 0
    %219 = vmatmul.mubr.bf16.gmra.mxu0 %v114
    %v220 = vpop.f32.mrf.mxu0
    %v221 = vadd.f32 %v136, %v220
    %v222 = vpop.f32.mrf.mxu0
    %v223 = vpop.f32.mrf.mxu0
    %v224 = vpop.f32.mrf.mxu0
    %225 = vdwg.mxu0
    %v226 = vmax.f32 %v221, 0.0
    %v227 = vpack.c.bf16 %v226, %v226
    %v228 = vld [vmem:[%s5] sm:$0xf]
    %v229 = vld [vmem:[%s5 + $0x4] sm:$0xf]
    %v230 = vld [vmem:[%s5 + $0x8] sm:$0xf]
    %v231 = vld [vmem:[%s5 + $0xc] sm:$0xf]
    %v232 = vld [vmem:[%s5 + $0x10] sm:$0xf]
    %v233 = vld [vmem:[%s5 + $0x14] sm:$0xf]
    %v234 = vld [vmem:[%s5 + $0x18] sm:$0xf]
    %v235 = vld [vmem:[%s5 + $0x1c] sm:$0xf]
    %v236 = vld [vmem:[%s5 + $0x20] sm:$0xf]
    %v237 = vld [vmem:[%s5 + $0x24] sm:$0xf]
    %v238 = vld [vmem:[%s5 + $0x28] sm:$0xf]
    %v239 = vld [vmem:[%s5 + $0x2c] sm:$0xf]
    %v240 = vld [vmem:[%s5 + $0x30] sm:$0xf]
    %v241 = vld [vmem:[%s5 + $0x34] sm:$0xf]
    %v242 = vld [vmem:[%s5 + $0x38] sm:$0xf]
    %v243 = vld [vmem:[%s5 + $0x3c] sm:$0xf]
    %v244 = vld [vmem:[%s6] sm:$0x1]
    %v246 = vlaneseq
    %v247 = vshrl.u32 %v246, 7
    %v248 = vsub.s32 0, %v247
    %v249 = vrot.slane %v244, %v248
    %v267 = vunpack.c.l.b16 %v228
    %v268 = vunpack.c.l.b16 %v229
    %v269 = vunpack.c.l.b16 %v230
    %v270 = vunpack.c.l.b16 %v231
    %v271 = vunpack.c.l.b16 %v232
    %v272 = vunpack.c.l.b16 %v233
    %v273 = vunpack.c.l.b16 %v234
    %v274 = vunpack.c.l.b16 %v235
    %v275 = vunpack.c.l.b16 %v236
    %v276 = vunpack.c.l.b16 %v237
    %v277 = vunpack.c.l.b16 %v238
    %v278 = vunpack.c.l.b16 %v239
    %v279 = vunpack.c.l.b16 %v240
    %v280 = vunpack.c.l.b16 %v241
    %v281 = vunpack.c.l.b16 %v242
    %v282 = vunpack.c.l.b16 %v243
    %v283 = vpack.c.b16 %v268, %v267
    %v284 = vpack.c.b16 %v270, %v269
    %v285 = vpack.c.b16 %v272, %v271
    %v286 = vpack.c.b16 %v274, %v273
    %v287 = vpack.c.b16 %v276, %v275
    %v288 = vpack.c.b16 %v278, %v277
    %v289 = vpack.c.b16 %v280, %v279
    %v290 = vpack.c.b16 %v282, %v281
    %299 = vmatprep.subr.bf16.mxu0 0
    %300 = vmatpush1.bf16.msra.mxu0 %v290
    %301 = vmatprep.subr.bf16.mxu0 0
    %302 = vmatpush1.bf16.msra.mxu0 %v289
    %303 = vmatprep.subr.bf16.mxu0 0
    %304 = vmatpush1.bf16.msra.mxu0 %v288
    %305 = vmatprep.subr.bf16.mxu0 0
    %306 = vmatpush1.bf16.msra.mxu0 %v287
    %307 = vmatprep.subr.bf16.mxu0 0
    %308 = vmatpush1.bf16.msra.mxu0 %v286
    %309 = vmatprep.subr.bf16.mxu0 0
    %310 = vmatpush1.bf16.msra.mxu0 %v285
    %311 = vmatprep.subr.bf16.mxu0 0
    %312 = vmatpush1.bf16.msra.mxu0 %v284
    %313 = vmatprep.subr.bf16.mxu0 0
    %314 = vmatpush1.bf16.msra.mxu0 %v283
    %315 = vmatprep.subr.bf16.mxu0 0
    %316 = vmatpush2.bf16.msra.mxu0 0
    %317 = vmatprep.subr.bf16.mxu0 0
    %318 = vmatpush2.bf16.msra.mxu0 0
    %319 = vmatprep.subr.bf16.mxu0 0
    %320 = vmatpush2.bf16.msra.mxu0 0
    %321 = vmatprep.subr.bf16.mxu0 0
    %322 = vmatpush2.bf16.msra.mxu0 0
    %323 = vmatprep.subr.bf16.mxu0 0
    %324 = vmatpush2.bf16.msra.mxu0 0
    %325 = vmatprep.subr.bf16.mxu0 0
    %326 = vmatpush2.bf16.msra.mxu0 0
    %327 = vmatprep.subr.bf16.mxu0 0
    %328 = vmatpush2.bf16.msra.mxu0 0
    %329 = vmatprep.subr.bf16.mxu0 0
    %330 = vmatpush2.bf16.msra.mxu0 0
    %331 = vmatprep.mubr.bf16.mxu0 0
    %332 = vmatmul.mubr.bf16.gmra.mxu0 %v227
    %v333 = vpop.f32.mrf.mxu0
    %v334 = vadd.f32 %v249, %v333
    %v335 = vpop.f32.mrf.mxu0
    %v336 = vpop.f32.mrf.mxu0
    %v337 = vpop.f32.mrf.mxu0
    %338 = vdwg.mxu0
    %v339 = vpack.c.bf16 %v334, %v334
    %vm340 = vcmask 125952
    %341 = vst.msk [vmem:[#allocation2] sm:$0xf] %vm340, %v339
    // Predicated region
    $region30: #{dqn_forward.1} parent=1 // pred_check
      _
    $region31: #{dqn_forward.1} parent=1 // pred_check_branch
      %343 = sbr.rel (0) target = $region33
    $region32: #{dqn_forward.1} parent=1 // pred_region
      %s345 = ssub.s32 64, 64
      %346 = vsyncadd [#allocation3], %s345
      %s348 = sshll.u32 [#allocation2], 4
      %s349 = int_to_ptr.vmem [resolvable:$true] %s348
      %351 = dma.vmem_to_hbm [thread:$0]  %s349, 64, %s7, [#allocation3]
    $region33: #{dqn_forward.1} parent=1 // pred_fallthru
      _
    // Predicated region
    $region34: #{dqn_forward.1} parent=1 // pred_check
      _
    $region35: #{dqn_forward.1} parent=1 // pred_check_branch
      %353 = sbr.rel (0) target = $region37
    $region36: #{dqn_forward.1} parent=1 // pred_region
      %354 = dma.done [#allocation3], 64
    $region37: #{dqn_forward.1} parent=1 // pred_fallthru
      _
    %355 = vsyncpa [#allocation3], 1

</llo_original>
